<compile_context>
chip_gen: v6e
topology: v6e:2x2x1
jax: 0.10.0
libtpu: 0.0.40
codegen_flags: <defaults>
</compile_context>

<pallas_src>
import functools

import jax
import jax.numpy as jnp
from jax.experimental import pallas as pl
from jax.experimental.pallas import tpu as pltpu

_LANE = 128       # lane width (last dim)
_SUBLANE = 8      # sublane count (second-to-last dim)
_BATCH_BLOCK = 256  # rows per grid step when batch is large (v7x megacore)


def _round_up(n, m):
    return (n + m - 1) // m * m


def _fused_mlp_kernel(*refs):
    """relu(...relu(relu(x@W1+b1)@W2+b2)...) in one pass.

    refs = (x_ref, w1_ref, b1_ref, ..., wN_ref, bN_ref, o_ref).
    Weights / x are bf16 (MXU-native operands); accumulation and bias-add are
    f32; activations stay in vregs between layers.
    """
    x_ref = refs[0]
    o_ref = refs[-1]
    num_layers = (len(refs) - 2) // 2
    h = x_ref[...]
    for i in range(num_layers):
        w_ref = refs[1 + 2 * i]
        b_ref = refs[2 + 2 * i]
        acc = jnp.dot(h, w_ref[...], preferred_element_type=jnp.float32)
        acc = jnp.maximum(acc + b_ref[...], 0.0)   # b_ref is (1, out) -> bcast
        if i + 1 < num_layers:
            # Next MXU matmul wants native (bf16) operands.
            h = acc.astype(w_ref.dtype)
        else:
            h = acc
    o_ref[...] = h.astype(o_ref.dtype)


def prepare_dqn_params(params, compute_dtype=jnp.bfloat16):
    """One-time padding of PyTorch-style params to lane-aligned slabs.

    params: sequence of (w_t [in, out], b [out]) with weights pre-transposed
            so the kernel does x @ W + b.
    Zero-padding is semantics-preserving for x@W+b followed by ReLU (padded
    feature columns carry weight 0 / bias 0 -> stay exactly 0, also in bf16).
    """
    padded = []
    for w, b in params:
        in_f, out_f = w.shape
        in_p = _round_up(in_f, _LANE)
        out_p = _round_up(out_f, _LANE)
        w_p = jnp.zeros((in_p, out_p), compute_dtype)
        w_p = w_p.at[:in_f, :out_f].set(w.astype(compute_dtype))
        b_p = jnp.zeros((1, out_p), jnp.float32)
        b_p = b_p.at[:, :out_f].set(b.astype(jnp.float32).reshape(1, -1))
        padded.append((w_p, b_p))
    return tuple(padded)


def _dqn_forward_pallas(x, padded_params, out_features):
    """Fused DQN forward on pre-padded params.

    x:             [B, in0] (any float dtype)
    padded_params: output of prepare_dqn_params (lane-aligned, bf16 weights)
    Returns [B, out_features] float32.
    """
    B, in0 = x.shape
    compute_dtype = padded_params[0][0].dtype
    in_pad = padded_params[0][0].shape[0]
    out_pad = padded_params[-1][0].shape[1]
    assert in0 <= in_pad, (in0, in_pad)

    # Batch padding / optional batch grid (only kicks in for large B).
    if B >= 2 * _BATCH_BLOCK:
        bm = _BATCH_BLOCK
        b_pad = _round_up(B, bm)
    else:
        bm = None
        b_pad = _round_up(B, _SUBLANE)

    # Single-op pad of x (no zeros + dynamic_update_slice on the hot path).
    x_p = jnp.pad(x.astype(compute_dtype),
                  ((0, b_pad - B), (0, in_pad - in0)))

    flat_inputs = [x_p]
    for w_p, b_p in padded_params:
        flat_inputs += [w_p, b_p]

    # Advisory cost hint for XLA's scheduler.
    flops = sum(2 * b_pad * w_p.shape[0] * w_p.shape[1]
                for w_p, _ in padded_params)
    bytes_accessed = sum(int(a.size) * a.dtype.itemsize for a in flat_inputs)
    bytes_accessed += b_pad * out_pad * 4
    cost = pl.CostEstimate(flops=flops, transcendentals=0,
                           bytes_accessed=bytes_accessed)

    # VMEM residency guard: every operand is a full-array block (Pallas
    # double-buffers), so the footprint must fit the scoped VMEM budget
    # (defaults 16 MiB v5e / 32 MiB v6e,v7x; physical 128/128/64 MiB).
    vmem_bytes = 2 * (bytes_accessed)  # rough: double-buffered
    cp_kwargs = {}
    if vmem_bytes > 12 * 1024 * 1024:
        # Raise the scoped limit instead of OOMing; beyond ~48 MiB (v7x
        # physical minus headroom) this should switch to a K-tiled grid.
        cp_kwargs["vmem_limit_bytes"] = int(min(vmem_bytes + (8 << 20),
                                                96 << 20))

    out_shape = jax.ShapeDtypeStruct((b_pad, out_pad), jnp.float32)

    if bm is None:
        # Gridless: kernel runs once, all operands whole-array resident
        # (~70 KB at the default DQN size).
        out_p = pl.pallas_call(
            _fused_mlp_kernel,
            out_shape=out_shape,
            in_specs=[pl.BlockSpec(memory_space=pltpu.MemorySpace.VMEM)
                      for _ in flat_inputs],
            out_specs=pl.BlockSpec(memory_space=pltpu.MemorySpace.VMEM),
            cost_estimate=cost,
            compiler_params=(pltpu.CompilerParams(**cp_kwargs)
                             if cp_kwargs else None),
        )(*flat_inputs)
    else:
        # Large batch: shard rows across grid steps / TensorCores (v7x).
        in_specs = [pl.BlockSpec((bm, in_pad), lambda i: (i, 0))]
        for w_p, b_p in padded_params:
            in_specs.append(pl.BlockSpec(w_p.shape, lambda i: (0, 0)))
            in_specs.append(pl.BlockSpec(b_p.shape, lambda i: (0, 0)))
        out_p = pl.pallas_call(
            _fused_mlp_kernel,
            out_shape=out_shape,
            grid=(b_pad // bm,),
            in_specs=in_specs,
            out_specs=pl.BlockSpec((bm, out_pad), lambda i: (i, 0)),
            cost_estimate=cost,
            compiler_params=pltpu.CompilerParams(
                dimension_semantics=("parallel",), **cp_kwargs),
        )(*flat_inputs)

    # Lane-dense padded slab -> real result.
    return out_p[:B, :out_features]


@functools.partial(jax.jit, static_argnums=(2,))
def dqn_forward(x, padded_params, out_features):
    # Single fused kernel dispatch; padded params are device buffers passed
    # straight through (no per-call re-padding / re-materialization).
    return _dqn_forward_pallas(x, padded_params, out_features)


def init_dqn_params(key, layers):
    """Deterministic init mirroring nn.Linear: U(-1/sqrt(in), 1/sqrt(in))."""
    params = []
    for i, in_f in enumerate(layers[:-1]):
        out_f = layers[i + 1]
        key, kw, kb = jax.random.split(key, 3)
        bound = 1.0 / jnp.sqrt(jnp.float32(in_f))
        # Store weight already transposed: [in, out]
        w_t = jax.random.uniform(kw, (in_f, out_f), jnp.float32, -bound, bound)
        b = jax.random.uniform(kb, (out_f,), jnp.float32, -bound, bound)
        params.append((w_t, b))
    return params


def dqn_forward_ref(x, params):
    # Pure-JAX f32 reference matching the PyTorch forward
    # (ReLU after every layer, including the last).
    x = x.astype(jnp.float32)
    for w_t, b in params:
        x = jnp.maximum(x @ w_t + b.reshape(1, -1), 0.0)
    return x


if __name__ == "__main__":
    # DQN([32, 64, 9]): 32-dim observation -> 64 hidden -> 9 actions
    # (|ACTIONS| = 3*3 = 9).
    layers = [32, 64, 9]
    batch = 2

    key = jax.random.PRNGKey(0)
    key, kx = jax.random.split(key)
    x = jax.random.normal(kx, (batch, layers[0]), jnp.float32)

    raw_params = init_dqn_params(key, layers)
    padded_params = prepare_dqn_params(raw_params)   # pad ONCE, at init

    out = dqn_forward(x, padded_params, layers[-1])
    out = jax.block_until_ready(out)

    ref = dqn_forward_ref(x, raw_params)
    assert out.shape == (batch, layers[-1]), out.shape
    # bf16 MXU operands / f32 accumulation vs f32 reference: loosened tolerance.
    assert jnp.allclose(out, ref, atol=5e-2, rtol=5e-2), "mismatch vs reference"

    print("KERNEL_OK")
</pallas_src>

<mosaic_0001>
module attributes {stable_mosaic.version = 11 : i64} {
  func.func @_fused_mlp_kernel(%arg0: memref<8x128xbf16, #tpu.memory_space<vmem>>, %arg1: memref<128x128xbf16, #tpu.memory_space<vmem>>, %arg2: memref<1x128xf32, #tpu.memory_space<vmem>>, %arg3: memref<128x128xbf16, #tpu.memory_space<vmem>>, %arg4: memref<1x128xf32, #tpu.memory_space<vmem>>, %arg5: memref<8x128xf32, #tpu.memory_space<vmem>>) attributes {dimension_semantics = [], scalar_prefetch = 0 : i64, scratch_operands = 0 : i64, tpu.core_type = #tpu.core_type<tc>} {
    %c0 = arith.constant 0 : index
    %c0_0 = arith.constant 0 : index
    %0 = vector.load %arg0[%c0, %c0_0] : memref<8x128xbf16, #tpu.memory_space<vmem>>, vector<8x128xbf16>
    %c0_1 = arith.constant 0 : index
    %c0_2 = arith.constant 0 : index
    %1 = vector.load %arg1[%c0_1, %c0_2] : memref<128x128xbf16, #tpu.memory_space<vmem>>, vector<128x128xbf16>
    %cst = arith.constant dense<0.000000e+00> : vector<8x128xf32>
    %2 = tpu.matmul %0, %1, %cst {dimension_numbers = #tpu.dot_dimension_numbers<[1], [0], [0], [1], [0, 0, 1, 1], [], []>} : vector<8x128xbf16>, vector<128x128xbf16>, vector<8x128xf32> -> vector<8x128xf32>
    %c0_3 = arith.constant 0 : index
    %c0_4 = arith.constant 0 : index
    %3 = vector.load %arg2[%c0_3, %c0_4] : memref<1x128xf32, #tpu.memory_space<vmem>>, vector<1x128xf32>
    %4 = vector.broadcast %3 : vector<1x128xf32> to vector<8x128xf32>
    %5 = arith.addf %2, %4 : vector<8x128xf32>
    %cst_5 = arith.constant 0.000000e+00 : f32
    %6 = vector.broadcast %cst_5 : f32 to vector<8x128xf32>
    %7 = arith.maximumf %5, %6 : vector<8x128xf32>
    %8 = arith.truncf %7 : vector<8x128xf32> to vector<8x128xbf16>
    %c0_6 = arith.constant 0 : index
    %c0_7 = arith.constant 0 : index
    %9 = vector.load %arg3[%c0_6, %c0_7] : memref<128x128xbf16, #tpu.memory_space<vmem>>, vector<128x128xbf16>
    %cst_8 = arith.constant dense<0.000000e+00> : vector<8x128xf32>
    %10 = tpu.matmul %8, %9, %cst_8 {dimension_numbers = #tpu.dot_dimension_numbers<[1], [0], [0], [1], [0, 0, 1, 1], [], []>} : vector<8x128xbf16>, vector<128x128xbf16>, vector<8x128xf32> -> vector<8x128xf32>
    %c0_9 = arith.constant 0 : index
    %c0_10 = arith.constant 0 : index
    %11 = vector.load %arg4[%c0_9, %c0_10] : memref<1x128xf32, #tpu.memory_space<vmem>>, vector<1x128xf32>
    %12 = vector.broadcast %11 : vector<1x128xf32> to vector<8x128xf32>
    %13 = arith.addf %10, %12 : vector<8x128xf32>
    %cst_11 = arith.constant 0.000000e+00 : f32
    %14 = vector.broadcast %cst_11 : f32 to vector<8x128xf32>
    %15 = arith.maximumf %13, %14 : vector<8x128xf32>
    %c0_12 = arith.constant 0 : index
    %c0_13 = arith.constant 0 : index
    %16 = vector.load %arg5[%c0_12, %c0_13] : memref<8x128xf32, #tpu.memory_space<vmem>>, vector<8x128xf32>
    tpu.vector_store %arg5[%c0_12, %c0_13], %15 {strides = array<i32>} : memref<8x128xf32, #tpu.memory_space<vmem>>, vector<8x128xf32>,
    return
  }
}

</mosaic_0001>

<llo_original>
// kernel: dqn_forward.1
$region0: #{dqn_forward.1}
  #allocation0 [shape = 'u32[]', space=smem, size = 0x4, offset = 0x4, fixed_abs, tag = 'smem constant byte address 0x4 - core index']
  #allocation1 [shape = 'u32[144,128]{1,0:T(1,128)}', space=vmem, size = 0x12000, scoped, tag = 'internal scratch']
  %s0 = inlined_call_operand.vmem [shape: bf16[8,128], index: 0, kind: input, shape index: {}]
  %s1 = inlined_call_operand.hbm [shape: bf16[128,128], index: 1, kind: input, shape index: {}]
  %s2 = inlined_call_operand.vmem [shape: f32[1,128], index: 2, kind: input, shape index: {}]
  %s3 = inlined_call_operand.hbm [shape: bf16[128,128], index: 3, kind: input, shape index: {}]
  %s4 = inlined_call_operand.vmem [shape: f32[1,128], index: 4, kind: input, shape index: {}]
  %s5 = inlined_call_operand.vmem [shape: f32[8,128], index: 5, kind: output, shape index: {}]
  %s6 = sld [smem:[#allocation0]]
  $region38: #{dqn_forward.1} parent=0
    _
  %s8 = ssub.s32 1, %s6
  %s9 = scalar_select 0, %s8, %s6
  $region1: #{dqn_forward.1} parent=0
    #allocation2 [shape = 'u8[32768]{0}', space=vmem, size = 0x8000, scoped, tag = 'input window, operand 1, single buffered']
    #allocation3 [shape = 's32[1]{0}', space=sflag, size = 0x4, scoped, tag = 'scoped memory for dqn_forward.1']
    #allocation4 [shape = 'u8[32768]{0}', space=vmem, size = 0x8000, scoped, tag = 'input window, operand 3, single buffered']
    #allocation5 [shape = 's32[1]{0}', space=sflag, size = 0x4, scoped, tag = 'scoped memory for dqn_forward.1']
    %10 = vsyncpa [#allocation3], 0
    %11 = vsyncpa [#allocation5], 0
    // Predicated region
    $region2: #{dqn_forward.1} parent=1 // pred_check
      _
    $region3: #{dqn_forward.1} parent=1 // pred_check_branch
      %13 = sbr.rel (0) target = $region5
    $region4: #{dqn_forward.1} parent=1 // pred_region
      _
    $region5: #{dqn_forward.1} parent=1 // pred_fallthru
      _
    // Predicated region
    $region6: #{dqn_forward.1} parent=1 // pred_check
      _
    $region7: #{dqn_forward.1} parent=1 // pred_check_branch
      %15 = sbr.rel (0) target = $region9
    $region8: #{dqn_forward.1} parent=1 // pred_region
      %s17 = ssub.s32 1024, 1024
      %18 = vsyncadd [#allocation3], %s17
      %s19 = sshll.u32 [#allocation2], 4
      %s20 = int_to_ptr.vmem [resolvable:$true] %s19
      %25 = dma.hbm_to_vmem [thread:$0]  %s1, 1024, %s20, [#allocation3], 64, 64, 4
    $region9: #{dqn_forward.1} parent=1 // pred_fallthru
      _
    // Predicated region
    $region10: #{dqn_forward.1} parent=1 // pred_check
      _
    $region11: #{dqn_forward.1} parent=1 // pred_check_branch
      %27 = sbr.rel (0) target = $region13
    $region12: #{dqn_forward.1} parent=1 // pred_region
      _
    $region13: #{dqn_forward.1} parent=1 // pred_fallthru
      _
    // Predicated region
    $region14: #{dqn_forward.1} parent=1 // pred_check
      _
    $region15: #{dqn_forward.1} parent=1 // pred_check_branch
      %29 = sbr.rel (0) target = $region17
    $region16: #{dqn_forward.1} parent=1 // pred_region
      %s31 = ssub.s32 1024, 1024
      %32 = vsyncadd [#allocation5], %s31
      %s33 = sshll.u32 [#allocation4], 4
      %s34 = int_to_ptr.vmem [resolvable:$true] %s33
      %39 = dma.hbm_to_vmem [thread:$0]  %s3, 1024, %s34, [#allocation5], 64, 64, 4
    $region17: #{dqn_forward.1} parent=1 // pred_fallthru
      _
    // Predicated region
    $region18: #{dqn_forward.1} parent=1 // pred_check
      _
    $region19: #{dqn_forward.1} parent=1 // pred_check_branch
      %41 = sbr.rel (0) target = $region21
    $region20: #{dqn_forward.1} parent=1 // pred_region
      _
    $region21: #{dqn_forward.1} parent=1 // pred_fallthru
      _
    // Predicated region
    $region22: #{dqn_forward.1} parent=1 // pred_check
      _
    $region23: #{dqn_forward.1} parent=1 // pred_check_branch
      %43 = sbr.rel (0) target = $region25
    $region24: #{dqn_forward.1} parent=1 // pred_region
      %44 = dma.done [#allocation3], 1024
    $region25: #{dqn_forward.1} parent=1 // pred_fallthru
      _
    // Predicated region
    $region26: #{dqn_forward.1} parent=1 // pred_check
      _
    $region27: #{dqn_forward.1} parent=1 // pred_check_branch
      %46 = sbr.rel (0) target = $region29
    $region28: #{dqn_forward.1} parent=1 // pred_region
      %47 = dma.done [#allocation5], 1024
    $region29: #{dqn_forward.1} parent=1 // pred_fallthru
      _
    %v49 = vld [vmem:[%s0] sm:$0xf]
    %v50 = vld [vmem:[#allocation2] sm:$0xf]
    %v51 = vld [vmem:[#allocation2 + $0x4] sm:$0xf]
    %v52 = vld [vmem:[#allocation2 + $0x8] sm:$0xf]
    %v53 = vld [vmem:[#allocation2 + $0xc] sm:$0xf]
    %v54 = vld [vmem:[#allocation2 + $0x10] sm:$0xf]
    %v55 = vld [vmem:[#allocation2 + $0x14] sm:$0xf]
    %v56 = vld [vmem:[#allocation2 + $0x18] sm:$0xf]
    %v57 = vld [vmem:[#allocation2 + $0x1c] sm:$0xf]
    %v58 = vld [vmem:[#allocation2 + $0x20] sm:$0xf]
    %v59 = vld [vmem:[#allocation2 + $0x24] sm:$0xf]
    %v60 = vld [vmem:[#allocation2 + $0x28] sm:$0xf]
    %v61 = vld [vmem:[#allocation2 + $0x2c] sm:$0xf]
    %v62 = vld [vmem:[#allocation2 + $0x30] sm:$0xf]
    %v63 = vld [vmem:[#allocation2 + $0x34] sm:$0xf]
    %v64 = vld [vmem:[#allocation2 + $0x38] sm:$0xf]
    %v65 = vld [vmem:[#allocation2 + $0x3c] sm:$0xf]
    %v66 = vld [vmem:[%s2] sm:$0x1]
    %v68 = vlaneseq
    %v69 = vshrl.u32 %v68, 7
    %v70 = vsub.s32 0, %v69
    %v71 = vrot.slane %v66, %v70
    %v89 = vunpack.c.l.b16 %v50
    %v90 = vunpack.c.l.b16 %v51
    %v91 = vunpack.c.l.b16 %v52
    %v92 = vunpack.c.l.b16 %v53
    %v93 = vunpack.c.l.b16 %v54
    %v94 = vunpack.c.l.b16 %v55
    %v95 = vunpack.c.l.b16 %v56
    %v96 = vunpack.c.l.b16 %v57
    %v97 = vunpack.c.l.b16 %v58
    %v98 = vunpack.c.l.b16 %v59
    %v99 = vunpack.c.l.b16 %v60
    %v100 = vunpack.c.l.b16 %v61
    %v101 = vunpack.c.l.b16 %v62
    %v102 = vunpack.c.l.b16 %v63
    %v103 = vunpack.c.l.b16 %v64
    %v104 = vunpack.c.l.b16 %v65
    %v105 = vpack.c.b16 %v90, %v89
    %v106 = vpack.c.b16 %v92, %v91
    %v107 = vpack.c.b16 %v94, %v93
    %v108 = vpack.c.b16 %v96, %v95
    %v109 = vpack.c.b16 %v98, %v97
    %v110 = vpack.c.b16 %v100, %v99
    %v111 = vpack.c.b16 %v102, %v101
    %v112 = vpack.c.b16 %v104, %v103
    %121 = vmatprep.subr.bf16.mxu0 0
    %122 = vmatpush1.bf16.msra.mxu0 %v112
    %123 = vmatprep.subr.bf16.mxu0 0
    %124 = vmatpush1.bf16.msra.mxu0 %v111
    %125 = vmatprep.subr.bf16.mxu0 0
    %126 = vmatpush1.bf16.msra.mxu0 %v110
    %127 = vmatprep.subr.bf16.mxu0 0
    %128 = vmatpush1.bf16.msra.mxu0 %v109
    %129 = vmatprep.subr.bf16.mxu0 0
    %130 = vmatpush1.bf16.msra.mxu0 %v108
    %131 = vmatprep.subr.bf16.mxu0 0
    %132 = vmatpush1.bf16.msra.mxu0 %v107
    %133 = vmatprep.subr.bf16.mxu0 0
    %134 = vmatpush1.bf16.msra.mxu0 %v106
    %135 = vmatprep.subr.bf16.mxu0 0
    %136 = vmatpush1.bf16.msra.mxu0 %v105
    %137 = vmatprep.subr.bf16.mxu0 0
    %138 = vmatpush2.bf16.msra.mxu0 0
    %139 = vmatprep.subr.bf16.mxu0 0
    %140 = vmatpush2.bf16.msra.mxu0 0
    %141 = vmatprep.subr.bf16.mxu0 0
    %142 = vmatpush2.bf16.msra.mxu0 0
    %143 = vmatprep.subr.bf16.mxu0 0
    %144 = vmatpush2.bf16.msra.mxu0 0
    %145 = vmatprep.subr.bf16.mxu0 0
    %146 = vmatpush2.bf16.msra.mxu0 0
    %147 = vmatprep.subr.bf16.mxu0 0
    %148 = vmatpush2.bf16.msra.mxu0 0
    %149 = vmatprep.subr.bf16.mxu0 0
    %150 = vmatpush2.bf16.msra.mxu0 0
    %151 = vmatprep.subr.bf16.mxu0 0
    %152 = vmatpush2.bf16.msra.mxu0 0
    %153 = vmatprep.mubr.bf16.mxu0 0
    %154 = vmatmul.mubr.bf16.gmra.mxu0 %v49
    %v155 = vpop.f32.mrf.mxu0
    %v156 = vadd.f32 %v71, %v155
    %v157 = vpop.f32.mrf.mxu0
    %v158 = vpop.f32.mrf.mxu0
    %v159 = vpop.f32.mrf.mxu0
    %160 = vdwg.mxu0
    %v161 = vmax.f32 %v156, 0.0
    %v162 = vpack.c.bf16 %v161, %v161
    %v163 = vld [vmem:[#allocation4] sm:$0xf]
    %v164 = vld [vmem:[#allocation4 + $0x4] sm:$0xf]
    %v165 = vld [vmem:[#allocation4 + $0x8] sm:$0xf]
    %v166 = vld [vmem:[#allocation4 + $0xc] sm:$0xf]
    %v167 = vld [vmem:[#allocation4 + $0x10] sm:$0xf]
    %v168 = vld [vmem:[#allocation4 + $0x14] sm:$0xf]
    %v169 = vld [vmem:[#allocation4 + $0x18] sm:$0xf]
    %v170 = vld [vmem:[#allocation4 + $0x1c] sm:$0xf]
    %v171 = vld [vmem:[#allocation4 + $0x20] sm:$0xf]
    %v172 = vld [vmem:[#allocation4 + $0x24] sm:$0xf]
    %v173 = vld [vmem:[#allocation4 + $0x28] sm:$0xf]
    %v174 = vld [vmem:[#allocation4 + $0x2c] sm:$0xf]
    %v175 = vld [vmem:[#allocation4 + $0x30] sm:$0xf]
    %v176 = vld [vmem:[#allocation4 + $0x34] sm:$0xf]
    %v177 = vld [vmem:[#allocation4 + $0x38] sm:$0xf]
    %v178 = vld [vmem:[#allocation4 + $0x3c] sm:$0xf]
    %v179 = vld [vmem:[%s4] sm:$0x1]
    %v181 = vlaneseq
    %v182 = vshrl.u32 %v181, 7
    %v183 = vsub.s32 0, %v182
    %v184 = vrot.slane %v179, %v183
    %v202 = vunpack.c.l.b16 %v163
    %v203 = vunpack.c.l.b16 %v164
    %v204 = vunpack.c.l.b16 %v165
    %v205 = vunpack.c.l.b16 %v166
    %v206 = vunpack.c.l.b16 %v167
    %v207 = vunpack.c.l.b16 %v168
    %v208 = vunpack.c.l.b16 %v169
    %v209 = vunpack.c.l.b16 %v170
    %v210 = vunpack.c.l.b16 %v171
    %v211 = vunpack.c.l.b16 %v172
    %v212 = vunpack.c.l.b16 %v173
    %v213 = vunpack.c.l.b16 %v174
    %v214 = vunpack.c.l.b16 %v175
    %v215 = vunpack.c.l.b16 %v176
    %v216 = vunpack.c.l.b16 %v177
    %v217 = vunpack.c.l.b16 %v178
    %v218 = vpack.c.b16 %v203, %v202
    %v219 = vpack.c.b16 %v205, %v204
    %v220 = vpack.c.b16 %v207, %v206
    %v221 = vpack.c.b16 %v209, %v208
    %v222 = vpack.c.b16 %v211, %v210
    %v223 = vpack.c.b16 %v213, %v212
    %v224 = vpack.c.b16 %v215, %v214
    %v225 = vpack.c.b16 %v217, %v216
    %234 = vmatprep.subr.bf16.mxu0 0
    %235 = vmatpush1.bf16.msra.mxu0 %v225
    %236 = vmatprep.subr.bf16.mxu0 0
    %237 = vmatpush1.bf16.msra.mxu0 %v224
    %238 = vmatprep.subr.bf16.mxu0 0
    %239 = vmatpush1.bf16.msra.mxu0 %v223
    %240 = vmatprep.subr.bf16.mxu0 0
    %241 = vmatpush1.bf16.msra.mxu0 %v222
    %242 = vmatprep.subr.bf16.mxu0 0
    %243 = vmatpush1.bf16.msra.mxu0 %v221
    %244 = vmatprep.subr.bf16.mxu0 0
    %245 = vmatpush1.bf16.msra.mxu0 %v220
    %246 = vmatprep.subr.bf16.mxu0 0
    %247 = vmatpush1.bf16.msra.mxu0 %v219
    %248 = vmatprep.subr.bf16.mxu0 0
    %249 = vmatpush1.bf16.msra.mxu0 %v218
    %250 = vmatprep.subr.bf16.mxu0 0
    %251 = vmatpush2.bf16.msra.mxu0 0
    %252 = vmatprep.subr.bf16.mxu0 0
    %253 = vmatpush2.bf16.msra.mxu0 0
    %254 = vmatprep.subr.bf16.mxu0 0
    %255 = vmatpush2.bf16.msra.mxu0 0
    %256 = vmatprep.subr.bf16.mxu0 0
    %257 = vmatpush2.bf16.msra.mxu0 0
    %258 = vmatprep.subr.bf16.mxu0 0
    %259 = vmatpush2.bf16.msra.mxu0 0
    %260 = vmatprep.subr.bf16.mxu0 0
    %261 = vmatpush2.bf16.msra.mxu0 0
    %262 = vmatprep.subr.bf16.mxu0 0
    %263 = vmatpush2.bf16.msra.mxu0 0
    %264 = vmatprep.subr.bf16.mxu0 0
    %265 = vmatpush2.bf16.msra.mxu0 0
    %266 = vmatprep.mubr.bf16.mxu0 0
    %267 = vmatmul.mubr.bf16.gmra.mxu0 %v162
    %v268 = vpop.f32.mrf.mxu0
    %v269 = vadd.f32 %v184, %v268
    %v270 = vpop.f32.mrf.mxu0
    %v271 = vpop.f32.mrf.mxu0
    %v272 = vpop.f32.mrf.mxu0
    %273 = vdwg.mxu0
    %v274 = vmax.f32 %v269, 0.0
    %275 = vst [vmem:[%s5] sm:$0xff] %v274
    // Predicated region
    $region30: #{dqn_forward.1} parent=1 // pred_check
      _
    $region31: #{dqn_forward.1} parent=1 // pred_check_branch
      %277 = sbr.rel (0) target = $region33
    $region32: #{dqn_forward.1} parent=1 // pred_region
      _
    $region33: #{dqn_forward.1} parent=1 // pred_fallthru
      _
    // Predicated region
    $region34: #{dqn_forward.1} parent=1 // pred_check
      _
    $region35: #{dqn_forward.1} parent=1 // pred_check_branch
      %279 = sbr.rel (0) target = $region37
    $region36: #{dqn_forward.1} parent=1 // pred_region
      _
    $region37: #{dqn_forward.1} parent=1 // pred_fallthru
      _
    %280 = vsyncpa [#allocation3], 1
    %281 = vsyncpa [#allocation5], 1

</llo_original>
